<compile_context>
chip_gen: v7x
topology: tpu7x:2x2x1
jax: 0.10.0
libtpu: 0.0.40
codegen_flags: <defaults>
</compile_context>

<pallas_src>
import functools

import jax
import jax.numpy as jnp
from jax.experimental import pallas as pl
from jax.experimental.pallas import tpu as pltpu


def _mlp_kernel(x_ref, w1_ref, b1_ref, w2_ref, b2_ref, w3_ref, b3_ref,
                w4_ref, b4_ref, o_ref):
    """Fused 4-layer MLP over a (tile_m, in_ch) batch tile.

    Intermediates are kept lane-dense in (features, batch) orientation; the
    output is written as a lane-dense (1, tile_m) row.  Weights use torch
    layout (out, in); biases are (out, 1) columns.  Accumulation is f32.
    """
    x = x_ref[...].astype(jnp.float32)                            # (tile_m, in)

    # Layer 1 as an NT matmul: W1(out,in) x x(tile_m,in)^T -> (out, tile_m).
    h = jax.lax.dot_general(
        w1_ref[...], x,
        dimension_numbers=(((1,), (1,)), ((), ())),
        preferred_element_type=jnp.float32) + b1_ref[...]
    h = jnp.maximum(h, 0.0)                                       # (out, tile_m)

    h = jnp.dot(w2_ref[...], h,
                preferred_element_type=jnp.float32) + b2_ref[...]
    h = jnp.maximum(h, 0.0)                                       # (hid, tile_m)

    h = jnp.dot(w3_ref[...], h,
                preferred_element_type=jnp.float32) + b3_ref[...]
    h = jnp.maximum(h, 0.0)                                       # (hid, tile_m)

    y = jnp.dot(w4_ref[...], h,
                preferred_element_type=jnp.float32) + b4_ref[...]
    o_ref[...] = y.astype(o_ref.dtype)                            # (1, tile_m)


def _pick_tile_m(n):
    """Rows per grid step: ~n/8 (>= 4 steps per TensorCore on v7x), rounded to
    a 128 multiple, clamped to [256, 4096] so the lane-padded config buffers
    plus intermediates stay far below every generation's scoped VMEM limit."""
    target = pl.cdiv(n, 8)
    tile = ((target + 127) // 128) * 128
    return int(max(256, min(4096, tile)))


def config_dense_forward(config, node_features, opcodes, edge_index, params,
                         *, tile_m=None):
    """Pallas wrapper. Only `config` participates in the compute (matches torch).

    config may be f32 or bf16 (bf16 halves the dominant HBM read on v5e); the
    kernel casts to f32 internally and all accumulation is f32.
    tile_m: rows per grid step (multiple of 128); None -> adaptive from N.
    """
    del node_features, opcodes, edge_index  # unused by the reference forward
    w1, b1, w2, b2, w3, b3, w4, b4 = params
    n, in_ch = config.shape
    out_ch = w1.shape[0]
    hidden = w2.shape[0]

    if tile_m is None:
        tile_m = _pick_tile_m(n)
    assert tile_m % 128 == 0, "tile_m must be a multiple of 128 (lane-dense out)"

    num_tiles = pl.cdiv(n, tile_m)   # ragged last block: OOB reads benign,
                                     # OOB output lanes dropped by masked store.

    # Weights/biases are tiny; load as full-extent constant-index blocks
    # (DMA'd once, resident across all grid steps).
    full = lambda shape: pl.BlockSpec(shape, lambda i: (0,) * len(shape))

    out = pl.pallas_call(
        _mlp_kernel,
        out_shape=jax.ShapeDtypeStruct((1, n), jnp.float32),
        grid_spec=pltpu.PrefetchScalarGridSpec(
            num_scalar_prefetch=0,
            grid=(num_tiles,),
            in_specs=[
                pl.BlockSpec((tile_m, in_ch), lambda i: (i, 0)),  # config tile
                full((out_ch, in_ch)),    # W1 (out, in)  -- torch layout
                full((out_ch, 1)),        # b1 column
                full((hidden, out_ch)),   # W2
                full((hidden, 1)),        # b2
                full((hidden, hidden)),   # W3
                full((hidden, 1)),        # b3
                full((1, hidden)),        # W4 row
                full((1, 1)),             # b4
            ],
            # Lane-dense output: each step writes a (1, tile_m) column-block
            # of the single output row.
            out_specs=pl.BlockSpec((1, tile_m), lambda i: (0, i)),
        ),
        compiler_params=pltpu.CompilerParams(
            dimension_semantics=("parallel",)),   # megacore split on v7x
    )(config, w1, b1, w2, b2, w3, b3, w4, b4)

    # (1, n) lane-dense row -> (n, 1) column (free reshape, same memory order).
    return out.reshape(n, 1)


def init_params(key, in_channels, out_channels, hidden):
    """Deterministic synthetic init (torch-Linear-style uniform bounds).

    Weights in torch layout (out, in); biases as (out, 1) columns.
    """
    def linear(key, fan_in, fan_out):
        kw, kb = jax.random.split(key)
        bound = 1.0 / jnp.sqrt(fan_in)
        w = jax.random.uniform(kw, (fan_out, fan_in), jnp.float32, -bound, bound)
        b = jax.random.uniform(kb, (fan_out, 1), jnp.float32, -bound, bound)
        return w, b

    k1, k2, k3, k4 = jax.random.split(key, 4)
    w1, b1 = linear(k1, in_channels, out_channels)
    w2, b2 = linear(k2, out_channels, hidden)
    w3, b3 = linear(k3, hidden, hidden)
    w4, b4 = linear(k4, hidden, 1)
    return (w1, b1, w2, b2, w3, b3, w4, b4)


def reference_forward(config, params):
    """Pure-JAX reference (batch, features) orientation, f32 accumulation."""
    w1, b1, w2, b2, w3, b3, w4, b4 = params
    h = config.astype(jnp.float32)
    h = jax.nn.relu(jnp.dot(h, w1.T, preferred_element_type=jnp.float32) + b1.T)
    h = jax.nn.relu(jnp.dot(h, w2.T, preferred_element_type=jnp.float32) + b2.T)
    h = jax.nn.relu(jnp.dot(h, w3.T, preferred_element_type=jnp.float32) + b3.T)
    return jnp.dot(h, w4.T, preferred_element_type=jnp.float32) + b4.T


if __name__ == "__main__":
    key = jax.random.PRNGKey(0)
    k_cfg, k_nf, k_par = jax.random.split(key, 3)

    # Small shapes consistent with the module's forward.  N is intentionally
    # not a tile multiple to exercise the ragged-last-block (no-pad) path.
    N, IN_CH, OUT_CH, HIDDEN = 1000, 16, 32, 32
    config = jax.random.normal(k_cfg, (N, IN_CH), jnp.float32)
    # Unused-by-forward inputs (present to match the module signature).
    node_features = jax.random.normal(k_nf, (N, 8), jnp.float32)
    opcodes = jnp.zeros((N,), jnp.int32)
    edge_index = jnp.zeros((2, 4), jnp.int32)

    params = init_params(k_par, IN_CH, OUT_CH, HIDDEN)

    fwd = jax.jit(functools.partial(config_dense_forward, params=params))

    # f32 config path: check against the pure-JAX reference.
    out = jax.block_until_ready(fwd(config, node_features, opcodes, edge_index))
    ref = reference_forward(config, params)
    assert out.shape == (N, 1)
    assert jnp.allclose(out, ref, atol=1e-5, rtol=1e-5), "f32 mismatch vs reference"

    # bf16-stored config (e.g. v5e bandwidth saving): feed bf16 directly; the
    # kernel casts in-kernel and accumulates in f32.
    config_bf16 = config.astype(jnp.bfloat16)
    out16 = jax.block_until_ready(
        fwd(config_bf16, node_features, opcodes, edge_index))
    ref16 = reference_forward(config_bf16, params)
    assert out16.shape == (N, 1)
    assert jnp.allclose(out16, ref16, atol=1e-4, rtol=1e-4), "bf16 mismatch vs reference"

    print("KERNEL_OK")
</pallas_src>

<mosaic_0001>
module attributes {stable_mosaic.version = 11 : i64} {
  func.func @_mlp_kernel(%arg0: i32, %arg1: memref<256x16xf32, #tpu.memory_space<vmem>>, %arg2: memref<32x16xf32, #tpu.memory_space<vmem>>, %arg3: memref<32x1xf32, #tpu.memory_space<vmem>>, %arg4: memref<32x32xf32, #tpu.memory_space<vmem>>, %arg5: memref<32x1xf32, #tpu.memory_space<vmem>>, %arg6: memref<32x32xf32, #tpu.memory_space<vmem>>, %arg7: memref<32x1xf32, #tpu.memory_space<vmem>>, %arg8: memref<1x32xf32, #tpu.memory_space<vmem>>, %arg9: memref<1x1xf32, #tpu.memory_space<vmem>>, %arg10: memref<1x256xf32, #tpu.memory_space<vmem>>) attributes {dimension_semantics = [#tpu.dimension_semantics<parallel>], iteration_bounds = array<i64: 4>, scalar_prefetch = 0 : i64, scratch_operands = 0 : i64, tpu.core_type = #tpu.core_type<tc>, window_params = [{transform_indices = @transform_0, window_bounds = array<i64: 256, 16>}, {pipeline_mode = #tpu.pipeline_mode<synchronous>, transform_indices = @transform_1, window_bounds = array<i64: 32, 16>}, {pipeline_mode = #tpu.pipeline_mode<synchronous>, transform_indices = @transform_2, window_bounds = array<i64: 32, 1>}, {pipeline_mode = #tpu.pipeline_mode<synchronous>, transform_indices = @transform_3, window_bounds = array<i64: 32, 32>}, {pipeline_mode = #tpu.pipeline_mode<synchronous>, transform_indices = @transform_4, window_bounds = array<i64: 32, 1>}, {pipeline_mode = #tpu.pipeline_mode<synchronous>, transform_indices = @transform_5, window_bounds = array<i64: 32, 32>}, {pipeline_mode = #tpu.pipeline_mode<synchronous>, transform_indices = @transform_6, window_bounds = array<i64: 32, 1>}, {pipeline_mode = #tpu.pipeline_mode<synchronous>, transform_indices = @transform_7, window_bounds = array<i64: 1, 32>}, {pipeline_mode = #tpu.pipeline_mode<synchronous>, transform_indices = @transform_8, window_bounds = array<i64: 1, 1>}, {transform_indices = @transform_9, window_bounds = array<i64: 1, 256>}]} {
    %c0 = arith.constant 0 : index
    %c0_0 = arith.constant 0 : index
    %0 = vector.load %arg1[%c0, %c0_0] : memref<256x16xf32, #tpu.memory_space<vmem>>, vector<256x16xf32>
    %c0_1 = arith.constant 0 : index
    %c0_2 = arith.constant 0 : index
    %1 = vector.load %arg2[%c0_1, %c0_2] : memref<32x16xf32, #tpu.memory_space<vmem>>, vector<32x16xf32>
    %cst = arith.constant dense<0.000000e+00> : vector<32x256xf32>
    %2 = tpu.matmul %1, %0, %cst {dimension_numbers = #tpu.dot_dimension_numbers<[1], [1], [0], [0], [0, 0, 1, 0], [], []>} : vector<32x16xf32>, vector<256x16xf32>, vector<32x256xf32> -> vector<32x256xf32>
    %c0_3 = arith.constant 0 : index
    %c0_4 = arith.constant 0 : index
    %3 = vector.load %arg3[%c0_3, %c0_4] : memref<32x1xf32, #tpu.memory_space<vmem>>, vector<32x1xf32>
    %4 = vector.broadcast %3 : vector<32x1xf32> to vector<32x256xf32>
    %5 = arith.addf %2, %4 : vector<32x256xf32>
    %cst_5 = arith.constant 0.000000e+00 : f32
    %6 = vector.broadcast %cst_5 : f32 to vector<32x256xf32>
    %7 = arith.maximumf %5, %6 : vector<32x256xf32>
    %c0_6 = arith.constant 0 : index
    %c0_7 = arith.constant 0 : index
    %8 = vector.load %arg4[%c0_6, %c0_7] : memref<32x32xf32, #tpu.memory_space<vmem>>, vector<32x32xf32>
    %cst_8 = arith.constant dense<0.000000e+00> : vector<32x256xf32>
    %9 = tpu.matmul %8, %7, %cst_8 {dimension_numbers = #tpu.dot_dimension_numbers<[1], [0], [0], [1], [0, 0, 1, 1], [], []>} : vector<32x32xf32>, vector<32x256xf32>, vector<32x256xf32> -> vector<32x256xf32>
    %c0_9 = arith.constant 0 : index
    %c0_10 = arith.constant 0 : index
    %10 = vector.load %arg5[%c0_9, %c0_10] : memref<32x1xf32, #tpu.memory_space<vmem>>, vector<32x1xf32>
    %11 = vector.broadcast %10 : vector<32x1xf32> to vector<32x256xf32>
    %12 = arith.addf %9, %11 : vector<32x256xf32>
    %cst_11 = arith.constant 0.000000e+00 : f32
    %13 = vector.broadcast %cst_11 : f32 to vector<32x256xf32>
    %14 = arith.maximumf %12, %13 : vector<32x256xf32>
    %c0_12 = arith.constant 0 : index
    %c0_13 = arith.constant 0 : index
    %15 = vector.load %arg6[%c0_12, %c0_13] : memref<32x32xf32, #tpu.memory_space<vmem>>, vector<32x32xf32>
    %cst_14 = arith.constant dense<0.000000e+00> : vector<32x256xf32>
    %16 = tpu.matmul %15, %14, %cst_14 {dimension_numbers = #tpu.dot_dimension_numbers<[1], [0], [0], [1], [0, 0, 1, 1], [], []>} : vector<32x32xf32>, vector<32x256xf32>, vector<32x256xf32> -> vector<32x256xf32>
    %c0_15 = arith.constant 0 : index
    %c0_16 = arith.constant 0 : index
    %17 = vector.load %arg7[%c0_15, %c0_16] : memref<32x1xf32, #tpu.memory_space<vmem>>, vector<32x1xf32>
    %18 = vector.broadcast %17 : vector<32x1xf32> to vector<32x256xf32>
    %19 = arith.addf %16, %18 : vector<32x256xf32>
    %cst_17 = arith.constant 0.000000e+00 : f32
    %20 = vector.broadcast %cst_17 : f32 to vector<32x256xf32>
    %21 = arith.maximumf %19, %20 : vector<32x256xf32>
    %c0_18 = arith.constant 0 : index
    %c0_19 = arith.constant 0 : index
    %22 = vector.load %arg8[%c0_18, %c0_19] : memref<1x32xf32, #tpu.memory_space<vmem>>, vector<1x32xf32>
    %cst_20 = arith.constant dense<0.000000e+00> : vector<1x256xf32>
    %23 = tpu.matmul %22, %21, %cst_20 {dimension_numbers = #tpu.dot_dimension_numbers<[1], [0], [0], [1], [0, 0, 1, 1], [], []>} : vector<1x32xf32>, vector<32x256xf32>, vector<1x256xf32> -> vector<1x256xf32>
    %c0_21 = arith.constant 0 : index
    %c0_22 = arith.constant 0 : index
    %24 = vector.load %arg9[%c0_21, %c0_22] : memref<1x1xf32, #tpu.memory_space<vmem>>, vector<1x1xf32>
    %25 = vector.broadcast %24 : vector<1x1xf32> to vector<1x256xf32>
    %26 = arith.addf %23, %25 : vector<1x256xf32>
    %c0_23 = arith.constant 0 : index
    %c0_24 = arith.constant 0 : index
    %27 = vector.load %arg10[%c0_23, %c0_24] : memref<1x256xf32, #tpu.memory_space<vmem>>, vector<1x256xf32>
    tpu.vector_store %arg10[%c0_23, %c0_24], %26 {strides = array<i32>} : memref<1x256xf32, #tpu.memory_space<vmem>>, vector<1x256xf32>,
    return
  }
  func.func @transform_0(%arg0: i32) -> (i32, i32) {
    %c0_i32 = arith.constant 0 : i32
    %c0_i32_0 = arith.constant 0 : i32
    return %arg0, %c0_i32 : i32, i32
  }
  func.func @transform_1(%arg0: i32) -> (i32, i32) {
    %c0_i32 = arith.constant 0 : i32
    %c0_i32_0 = arith.constant 0 : i32
    %c0_i32_1 = arith.constant 0 : i32
    return %c0_i32, %c0_i32_0 : i32, i32
  }
  func.func @transform_2(%arg0: i32) -> (i32, i32) {
    %c0_i32 = arith.constant 0 : i32
    %c0_i32_0 = arith.constant 0 : i32
    %c0_i32_1 = arith.constant 0 : i32
    return %c0_i32, %c0_i32_0 : i32, i32
  }
  func.func @transform_3(%arg0: i32) -> (i32, i32) {
    %c0_i32 = arith.constant 0 : i32
    %c0_i32_0 = arith.constant 0 : i32
    %c0_i32_1 = arith.constant 0 : i32
    return %c0_i32, %c0_i32_0 : i32, i32
  }
  func.func @transform_4(%arg0: i32) -> (i32, i32) {
    %c0_i32 = arith.constant 0 : i32
    %c0_i32_0 = arith.constant 0 : i32
    %c0_i32_1 = arith.constant 0 : i32
    return %c0_i32, %c0_i32_0 : i32, i32
  }
  func.func @transform_5(%arg0: i32) -> (i32, i32) {
    %c0_i32 = arith.constant 0 : i32
    %c0_i32_0 = arith.constant 0 : i32
    %c0_i32_1 = arith.constant 0 : i32
    return %c0_i32, %c0_i32_0 : i32, i32
  }
  func.func @transform_6(%arg0: i32) -> (i32, i32) {
    %c0_i32 = arith.constant 0 : i32
    %c0_i32_0 = arith.constant 0 : i32
    %c0_i32_1 = arith.constant 0 : i32
    return %c0_i32, %c0_i32_0 : i32, i32
  }
  func.func @transform_7(%arg0: i32) -> (i32, i32) {
    %c0_i32 = arith.constant 0 : i32
    %c0_i32_0 = arith.constant 0 : i32
    %c0_i32_1 = arith.constant 0 : i32
    return %c0_i32, %c0_i32_0 : i32, i32
  }
  func.func @transform_8(%arg0: i32) -> (i32, i32) {
    %c0_i32 = arith.constant 0 : i32
    %c0_i32_0 = arith.constant 0 : i32
    %c0_i32_1 = arith.constant 0 : i32
    return %c0_i32, %c0_i32_0 : i32, i32
  }
  func.func @transform_9(%arg0: i32) -> (i32, i32) {
    %c0_i32 = arith.constant 0 : i32
    %c0_i32_0 = arith.constant 0 : i32
    return %c0_i32, %arg0 : i32, i32
  }
}

</mosaic_0001>

<llo_original>
// kernel: config_dense_forward.1
$region0: #{config_dense_forward.1}
  #allocation0 [shape = 'u32[]', space=smem, size = 0x4, offset = 0x4, fixed_abs, tag = 'smem constant byte address 0x4 - core index']
  #allocation1 [shape = 'u32[144,128]{1,0:T(1,128)}', space=vmem, size = 0x12000, scoped, tag = 'internal scratch']
  #allocation2 [shape = 'f32[1,1]{1,0:T(1,128)S(1)}', space=vmem, size = 0x200, scoped, tag = 'scoped memory for config_dense_forward.1']
  %s0 = inlined_call_operand.vmem [shape: f32[1000,16], index: 0, kind: input, shape index: {}]
  %s1 = inlined_call_operand.vmem [shape: f32[32,16], index: 1, kind: input, shape index: {}]
  %s2 = inlined_call_operand.vmem [shape: f32[32,1], index: 2, kind: input, shape index: {}]
  %s3 = inlined_call_operand.vmem [shape: f32[32,32], index: 3, kind: input, shape index: {}]
  %s4 = inlined_call_operand.vmem [shape: f32[32,1], index: 4, kind: input, shape index: {}]
  %s5 = inlined_call_operand.vmem [shape: f32[32,32], index: 5, kind: input, shape index: {}]
  %s6 = inlined_call_operand.vmem [shape: f32[32,1], index: 6, kind: input, shape index: {}]
  %s7 = inlined_call_operand.vmem [shape: f32[1,32], index: 7, kind: input, shape index: {}]
  %s8 = inlined_call_operand.<no memory space> [shape: f32[1,1], index: 8, kind: input, shape index: {}]
  %s9 = inlined_call_operand.hbm [shape: f32[1,1000], index: 9, kind: output, shape index: {}]
  %s10 = sld [smem:[#allocation0]]
  $region69: #{config_dense_forward.1} parent=0
    _
  %s12 = ssub.s32 1, %s10
  %s13 = scalar_select 0, %s12, %s10
  %v14 = vstv %s8
  %15 = vst [vmem:[#allocation2] sm:$0x1] %v14
  $region1: #{config_dense_forward.1} parent=0
    #allocation3 [shape = 'u8[2048]{0}', space=vmem, size = 0x800, scoped, tag = 'output window, operand 0']
    #allocation4 [shape = 's32[2]{0}', space=sflag, size = 0x8, scoped, tag = 'scoped memory for config_dense_forward.1']
    %16 = vsyncpa [#allocation4], 0
    %s17 = scalar_lea.sflag [#allocation4], 1
    %18 = vsyncpa %s17, 0
    loop: start=0, step=1, limit=6
    $region2: #{config_dense_forward.1} parent=1 // loop_pre_header
      _
    $region3: #{config_dense_forward.1} parent=1 // loop_header
      %s20 = sphi 0, %s24
      %p21 = scmp.ge.s32.totalorder %s20, 6
      %s30 = sphi 0, %s32
      %s33 = sphi 0, %s30
      %s34 = sphi 0, %s33
      %s50 = sphi 0, %s34
      %s54 = sphi 0, %s54
      %s56 = sphi 0, %s54
      %s57 = sphi 0, %s56
      %s71 = sphi 0, %s57
      %s75 = sphi 0, %s75
      %s77 = sphi 0, %s75
      %s78 = sphi 0, %s77
      %s92 = sphi 0, %s78
      %s96 = sphi 0, %s96
      %s98 = sphi 0, %s96
      %s99 = sphi 0, %s98
      %s113 = sphi 0, %s99
      %s117 = sphi 0, %s117
      %s119 = sphi 0, %s117
      %s120 = sphi 0, %s119
      %s134 = sphi 0, %s120
      %s138 = sphi 0, %s138
      %s140 = sphi 0, %s138
      %s141 = sphi 0, %s140
      %s155 = sphi 0, %s141
      %s159 = sphi 0, %s159
      %s161 = sphi 0, %s159
      %s162 = sphi 0, %s161
      %s176 = sphi 0, %s162
      %s180 = sphi 0, %s180
      %s182 = sphi 0, %s180
      %s183 = sphi 0, %s182
      %s197 = sphi 0, %s183
      %s201 = sphi 0, %s201
      %s203 = sphi 0, %s201
      %s204 = sphi 0, %s203
      %s218 = sphi 0, %s204
      %s224 = sphi 0, %s226
      %s227 = sphi 0, %s224
      %s228 = sphi 0, %s227
      %s244 = sphi 0, %s228
    $region4: #{config_dense_forward.1} parent=1 // loop_header_branch
      %23 = sbr.rel (%p21) target = $region8
    $region5: #{config_dense_forward.1} parent=1 // loop_body
      %s25 = ssub.s32 %s20, 1
      %s26 = ssub.s32 %s20, 2
      %s27 = sadd.s32 %s20, 1
      %s28 = ssub.s32 %s20, %s27
      %p29 = scmp.eq.s32.totalorder %s28, 0
      %s31 = sadd.s32 %s30, 1
      %s32 = scalar_select %p29, %s30, %s31
      %p35 = pneg %p29
      %p36 = scmp.eq.s32.totalorder %s20, 3
      %p37 = por %p35, %p36
      %p38 = scmp.ne.s32.totalorder %s30, %s33
      %p39 = scmp.eq.s32.totalorder %s20, 0
      %p40 = por %p38, %p39
      %p41 = scmp.ne.s32.totalorder %s30, %s33
      %p42 = scmp.eq.s32.totalorder %s25, 3
      %p43 = por %p41, %p42
      %p44 = scmp.ne.s32.totalorder %s33, %s34
      %p45 = scmp.eq.s32.totalorder %s25, 0
      %p46 = por %p44, %p45
      %p47 = scmp.ne.s32.totalorder %s33, %s34
      %p48 = scmp.eq.s32.totalorder %s26, 3
      %p49 = por %p47, %p48
      %p51 = scmp.ne.s32.totalorder %s34, %s50
      %p52 = scmp.eq.s32.totalorder %s26, 0
      %p53 = por %p51, %p52
      %s55 = sadd.s32 %s54, 1
      %p58 = scmp.eq.s32.totalorder %s20, 3
      %p59 = scmp.ne.s32.totalorder %s54, %s56
      %p60 = scmp.eq.s32.totalorder %s20, 0
      %p61 = por %p59, %p60
      %p62 = scmp.ne.s32.totalorder %s54, %s56
      %p63 = scmp.eq.s32.totalorder %s25, 3
      %p64 = por %p62, %p63
      %p65 = scmp.ne.s32.totalorder %s56, %s57
      %p66 = scmp.eq.s32.totalorder %s25, 0
      %p67 = por %p65, %p66
      %p68 = scmp.ne.s32.totalorder %s56, %s57
      %p69 = scmp.eq.s32.totalorder %s26, 3
      %p70 = por %p68, %p69
      %p72 = scmp.ne.s32.totalorder %s57, %s71
      %p73 = scmp.eq.s32.totalorder %s26, 0
      %p74 = por %p72, %p73
      %s76 = sadd.s32 %s75, 1
      %p79 = scmp.eq.s32.totalorder %s20, 3
      %p80 = scmp.ne.s32.totalorder %s75, %s77
      %p81 = scmp.eq.s32.totalorder %s20, 0
      %p82 = por %p80, %p81
      %p83 = scmp.ne.s32.totalorder %s75, %s77
      %p84 = scmp.eq.s32.totalorder %s25, 3
      %p85 = por %p83, %p84
      %p86 = scmp.ne.s32.totalorder %s77, %s78
      %p87 = scmp.eq.s32.totalorder %s25, 0
      %p88 = por %p86, %p87
      %p89 = scmp.ne.s32.totalorder %s77, %s78
      %p90 = scmp.eq.s32.totalorder %s26, 3
      %p91 = por %p89, %p90
      %p93 = scmp.ne.s32.totalorder %s78, %s92
      %p94 = scmp.eq.s32.totalorder %s26, 0
      %p95 = por %p93, %p94
      %s97 = sadd.s32 %s96, 1
      %p100 = scmp.eq.s32.totalorder %s20, 3
      %p101 = scmp.ne.s32.totalorder %s96, %s98
      %p102 = scmp.eq.s32.totalorder %s20, 0
      %p103 = por %p101, %p102
      %p104 = scmp.ne.s32.totalorder %s96, %s98
      %p105 = scmp.eq.s32.totalorder %s25, 3
      %p106 = por %p104, %p105
      %p107 = scmp.ne.s32.totalorder %s98, %s99
      %p108 = scmp.eq.s32.totalorder %s25, 0
      %p109 = por %p107, %p108
      %p110 = scmp.ne.s32.totalorder %s98, %s99
      %p111 = scmp.eq.s32.totalorder %s26, 3
      %p112 = por %p110, %p111
      %p114 = scmp.ne.s32.totalorder %s99, %s113
      %p115 = scmp.eq.s32.totalorder %s26, 0
      %p116 = por %p114, %p115
      %s118 = sadd.s32 %s117, 1
      %p121 = scmp.eq.s32.totalorder %s20, 3
      %p122 = scmp.ne.s32.totalorder %s117, %s119
      %p123 = scmp.eq.s32.totalorder %s20, 0
      %p124 = por %p122, %p123
      %p125 = scmp.ne.s32.totalorder %s117, %s119
      %p126 = scmp.eq.s32.totalorder %s25, 3
      %p127 = por %p125, %p126
      %p128 = scmp.ne.s32.totalorder %s119, %s120
      %p129 = scmp.eq.s32.totalorder %s25, 0
      %p130 = por %p128, %p129
      %p131 = scmp.ne.s32.totalorder %s119, %s120
      %p132 = scmp.eq.s32.totalorder %s26, 3
      %p133 = por %p131, %p132
      %p135 = scmp.ne.s32.totalorder %s120, %s134
      %p136 = scmp.eq.s32.totalorder %s26, 0
      %p137 = por %p135, %p136
      %s139 = sadd.s32 %s138, 1
      %p142 = scmp.eq.s32.totalorder %s20, 3
      %p143 = scmp.ne.s32.totalorder %s138, %s140
      %p144 = scmp.eq.s32.totalorder %s20, 0
      %p145 = por %p143, %p144
      %p146 = scmp.ne.s32.totalorder %s138, %s140
      %p147 = scmp.eq.s32.totalorder %s25, 3
      %p148 = por %p146, %p147
      %p149 = scmp.ne.s32.totalorder %s140, %s141
      %p150 = scmp.eq.s32.totalorder %s25, 0
      %p151 = por %p149, %p150
      %p152 = scmp.ne.s32.totalorder %s140, %s141
      %p153 = scmp.eq.s32.totalorder %s26, 3
      %p154 = por %p152, %p153
      %p156 = scmp.ne.s32.totalorder %s141, %s155
      %p157 = scmp.eq.s32.totalorder %s26, 0
      %p158 = por %p156, %p157
      %s160 = sadd.s32 %s159, 1
      %p163 = scmp.eq.s32.totalorder %s20, 3
      %p164 = scmp.ne.s32.totalorder %s159, %s161
      %p165 = scmp.eq.s32.totalorder %s20, 0
      %p166 = por %p164, %p165
      %p167 = scmp.ne.s32.totalorder %s159, %s161
      %p168 = scmp.eq.s32.totalorder %s25, 3
      %p169 = por %p167, %p168
      %p170 = scmp.ne.s32.totalorder %s161, %s162
      %p171 = scmp.eq.s32.totalorder %s25, 0
      %p172 = por %p170, %p171
      %p173 = scmp.ne.s32.totalorder %s161, %s162
      %p174 = scmp.eq.s32.totalorder %s26, 3
      %p175 = por %p173, %p174
      %p177 = scmp.ne.s32.totalorder %s162, %s176
      %p178 = scmp.eq.s32.totalorder %s26, 0
      %p179 = por %p177, %p178
      %s181 = sadd.s32 %s180, 1
      %p184 = scmp.eq.s32.totalorder %s20, 3
      %p185 = scmp.ne.s32.totalorder %s180, %s182
      %p186 = scmp.eq.s32.totalorder %s20, 0
      %p187 = por %p185, %p186
      %p188 = scmp.ne.s32.totalorder %s180, %s182
      %p189 = scmp.eq.s32.totalorder %s25, 3
      %p190 = por %p188, %p189
      %p191 = scmp.ne.s32.totalorder %s182, %s183
      %p192 = scmp.eq.s32.totalorder %s25, 0
      %p193 = por %p191, %p192
      %p194 = scmp.ne.s32.totalorder %s182, %s183
      %p195 = scmp.eq.s32.totalorder %s26, 3
      %p196 = por %p194, %p195
      %p198 = scmp.ne.s32.totalorder %s183, %s197
      %p199 = scmp.eq.s32.totalorder %s26, 0
      %p200 = por %p198, %p199
      %s202 = sadd.s32 %s201, 1
      %p205 = scmp.eq.s32.totalorder %s20, 3
      %p206 = scmp.ne.s32.totalorder %s201, %s203
      %p207 = scmp.eq.s32.totalorder %s20, 0
      %p208 = por %p206, %p207
      %p209 = scmp.ne.s32.totalorder %s201, %s203
      %p210 = scmp.eq.s32.totalorder %s25, 3
      %p211 = por %p209, %p210
      %p212 = scmp.ne.s32.totalorder %s203, %s204
      %p213 = scmp.eq.s32.totalorder %s25, 0
      %p214 = por %p212, %p213
      %p215 = scmp.ne.s32.totalorder %s203, %s204
      %p216 = scmp.eq.s32.totalorder %s26, 3
      %p217 = por %p215, %p216
      %p219 = scmp.ne.s32.totalorder %s204, %s218
      %p220 = scmp.eq.s32.totalorder %s26, 0
      %p221 = por %p219, %p220
      %s222 = ssub.s32 %s20, %s27
      %p223 = scmp.eq.s32.totalorder %s222, 0
      %s225 = sadd.s32 %s224, 1
      %s226 = scalar_select %p223, %s224, %s225
      %p229 = pneg %p223
      %p230 = scmp.eq.s32.totalorder %s20, 3
      %p231 = por %p229, %p230
      %p232 = scmp.ne.s32.totalorder %s224, %s227
      %p233 = scmp.eq.s32.totalorder %s20, 0
      %p234 = por %p232, %p233
      %p235 = scmp.ne.s32.totalorder %s224, %s227
      %p236 = scmp.eq.s32.totalorder %s25, 3
      %p237 = por %p235, %p236
      %p238 = scmp.ne.s32.totalorder %s227, %s228
      %p239 = scmp.eq.s32.totalorder %s25, 0
      %p240 = por %p238, %p239
      %p241 = scmp.ne.s32.totalorder %s227, %s228
      %p242 = scmp.eq.s32.totalorder %s26, 3
      %p243 = por %p241, %p242
      %p245 = scmp.ne.s32.totalorder %s228, %s244
      %p246 = scmp.eq.s32.totalorder %s26, 0
      %p247 = por %p245, %p246
      %p248 = scmp.le.s32.totalorder 1, %s20
      %p249 = scmp.lt.s32.totalorder %s20, 5
      %p250 = pnand %p248, %p249
      %p251 = pneg %p250
      // Predicated region
      $region9: #{config_dense_forward.1} parent=5 // pred_check
        _
      $region10: #{config_dense_forward.1} parent=5 // pred_check_branch
        %253 = sbr.rel (%p250) target = $region12
      $region11: #{config_dense_forward.1} parent=5 // pred_region
        %s254 = ssub.s32 %s20, 1
        // Predicated region
        $region13: #{config_dense_forward.1} parent=11 // pred_check
          %p255 = pneg %p67
        $region14: #{config_dense_forward.1} parent=11 // pred_check_branch
          %257 = sbr.rel (%p255) target = $region16
        $region15: #{config_dense_forward.1} parent=11 // pred_region
          _
        $region16: #{config_dense_forward.1} parent=11 // pred_fallthru
          _
        // Predicated region
        $region17: #{config_dense_forward.1} parent=11 // pred_check
          %p258 = pneg %p88
        $region18: #{config_dense_forward.1} parent=11 // pred_check_branch
          %260 = sbr.rel (%p258) target = $region20
        $region19: #{config_dense_forward.1} parent=11 // pred_region
          _
        $region20: #{config_dense_forward.1} parent=11 // pred_fallthru
          _
        // Predicated region
        $region21: #{config_dense_forward.1} parent=11 // pred_check
          %p261 = pneg %p109
        $region22: #{config_dense_forward.1} parent=11 // pred_check_branch
          %263 = sbr.rel (%p261) target = $region24
        $region23: #{config_dense_forward.1} parent=11 // pred_region
          _
        $region24: #{config_dense_forward.1} parent=11 // pred_fallthru
          _
        // Predicated region
        $region25: #{config_dense_forward.1} parent=11 // pred_check
          %p264 = pneg %p130
        $region26: #{config_dense_forward.1} parent=11 // pred_check_branch
          %266 = sbr.rel (%p264) target = $region28
        $region27: #{config_dense_forward.1} parent=11 // pred_region
          _
        $region28: #{config_dense_forward.1} parent=11 // pred_fallthru
          _
        // Predicated region
        $region29: #{config_dense_forward.1} parent=11 // pred_check
          %p267 = pneg %p151
        $region30: #{config_dense_forward.1} parent=11 // pred_check_branch
          %269 = sbr.rel (%p267) target = $region32
        $region31: #{config_dense_forward.1} parent=11 // pred_region
          _
        $region32: #{config_dense_forward.1} parent=11 // pred_fallthru
          _
        // Predicated region
        $region33: #{config_dense_forward.1} parent=11 // pred_check
          %p270 = pneg %p172
        $region34: #{config_dense_forward.1} parent=11 // pred_check_branch
          %272 = sbr.rel (%p270) target = $region36
        $region35: #{config_dense_forward.1} parent=11 // pred_region
          _
        $region36: #{config_dense_forward.1} parent=11 // pred_fallthru
          _
        // Predicated region
        $region37: #{config_dense_forward.1} parent=11 // pred_check
          %p273 = pneg %p193
        $region38: #{config_dense_forward.1} parent=11 // pred_check_branch
          %275 = sbr.rel (%p273) target = $region40
        $region39: #{config_dense_forward.1} parent=11 // pred_region
          _
        $region40: #{config_dense_forward.1} parent=11 // pred_fallthru
          _
        // Predicated region
        $region41: #{config_dense_forward.1} parent=11 // pred_check
          %p276 = pneg %p214
        $region42: #{config_dense_forward.1} parent=11 // pred_check_branch
          %278 = sbr.rel (%p276) target = $region44
        $region43: #{config_dense_forward.1} parent=11 // pred_region
          _
        $region44: #{config_dense_forward.1} parent=11 // pred_fallthru
          _
      $region12: #{config_dense_forward.1} parent=5 // pred_fallthru
        _
      %p279 = scmp.lt.s32.totalorder %s20, 4
      // Predicated region
      $region45: #{config_dense_forward.1} parent=5 // pred_check
        %p280 = pneg %p279
      $region46: #{config_dense_forward.1} parent=5 // pred_check_branch
        %282 = sbr.rel (%p280) target = $region48
      $region47: #{config_dense_forward.1} parent=5 // pred_region
        // Predicated region
        $region49: #{config_dense_forward.1} parent=47 // pred_check
          %p283 = pneg %p40
        $region50: #{config_dense_forward.1} parent=47 // pred_check_branch
          %285 = sbr.rel (%p283) target = $region52
        $region51: #{config_dense_forward.1} parent=47 // pred_region
          %s286 = smul.u32 32, %s20
          %s287 = ssub.s32 125, %s286
          %p288 = scmp.lt.s32.totalorder %s287, 32
          %s289 = scalar_select %p288, %s287, 32
          %s290 = smul.u32 128, %s289
          %p291 = scmp.lt.s32.totalorder %s286, 124
          %s292 = scalar_select %p291, %s286, 124
          %s293 = smul.addr %s292, 8
          %s294 = scalar_lea.vmem %s0, %s293
          %s295 = smul.u32 32, %s20
          %s296 = ssub.s32 125, %s295
          %p297 = scmp.lt.s32.totalorder %s296, 32
          %s298 = scalar_select %p297, %s296, 32
          %s299 = smul.u32 128, %s298
        $region52: #{config_dense_forward.1} parent=47 // pred_fallthru
          _
      $region48: #{config_dense_forward.1} parent=5 // pred_fallthru
        _
      %p300 = scmp.le.s32.totalorder 1, %s20
      %p301 = scmp.lt.s32.totalorder %s20, 5
      %p302 = pnand %p300, %p301
      %p303 = pneg %p302
      // Predicated region
      $region53: #{config_dense_forward.1} parent=5 // pred_check
        _
      $region54: #{config_dense_forward.1} parent=5 // pred_check_branch
        %305 = sbr.rel (%p302) target = $region56
      $region55: #{config_dense_forward.1} parent=5 // pred_region
        %s306 = ssub.s32 %s20, 1
        %s307 = smul.u32 32, %s25
        %s308 = ssub.s32 125, %s307
        %p309 = scmp.lt.s32.totalorder %s308, 32
        %s310 = scalar_select %p309, %s308, 32
        %s311 = smul.u32 128, %s310
        %p312 = scmp.lt.s32.totalorder %s307, 124
        %s313 = scalar_select %p312, %s307, 124
        %s314 = smul.addr %s313, 8
        %s315 = scalar_lea.vmem %s0, %s314
        %p316 = pneg %p46
        %p317 = pneg %p43
        %p318 = pneg %p67
        %p319 = pneg %p64
        %p320 = pneg %p88
        %p321 = pneg %p85
        %p322 = pneg %p109
        %p323 = pneg %p106
        %p324 = pneg %p130
        %p325 = pneg %p127
        %p326 = pneg %p151
        %p327 = pneg %p148
        %p328 = pneg %p172
        %p329 = pneg %p169
        %p330 = pneg %p193
        %p331 = pneg %p190
        %p332 = pneg %p214
        %p333 = pneg %p211
        %p334 = pneg %p240
        %p335 = pneg %p237
        %s336 = sand.u32 %s227, 1
        %s337 = scalar_lea.sflag [#allocation4], %s336
        %s338 = sand.u32 %s227, 1
        %s339 = smul.addr %s338, 2
        %s340 = scalar_lea.vmem [#allocation3], %s339
        %s341 = smul.u32 32, %s25
        %s342 = ssub.s32 125, %s341
        %p343 = scmp.lt.s32.totalorder %s342, 32
        %s344 = scalar_select %p343, %s342, 32
        %s345 = smul.u32 128, %s344
        %p346 = scmp.lt.s32.totalorder %s341, 124
        %s347 = scalar_select %p346, %s341, 124
        %s348 = smul.addr %s347, 8
        %s349 = scalar_lea.vmem %s0, %s348
        %s350 = smul.u32 32, %s25
        %s351 = ssub.s32 125, %s350
        %p352 = scmp.lt.s32.totalorder %s351, 32
        %s353 = scalar_select %p352, %s351, 32
        %s354 = smul.u32 128, %s353
        %s355 = smul.u32 2, %s25
        %v356 = vld [vmem:[%s349] sm:$0xff]
        %v357 = vld [vmem:[%s349 + $0x8] sm:$0xff]
        %v358 = vld [vmem:[%s349 + $0x10] sm:$0xff]
        %v359 = vld [vmem:[%s349 + $0x18] sm:$0xff]
        %v360 = vld [vmem:[%s349 + $0x20] sm:$0xff]
        %v361 = vld [vmem:[%s349 + $0x28] sm:$0xff]
        %v362 = vld [vmem:[%s349 + $0x30] sm:$0xff]
        %v363 = vld [vmem:[%s349 + $0x38] sm:$0xff]
        %v364 = vld [vmem:[%s349 + $0x40] sm:$0xff]
        %v365 = vld [vmem:[%s349 + $0x48] sm:$0xff]
        %v366 = vld [vmem:[%s349 + $0x50] sm:$0xff]
        %v367 = vld [vmem:[%s349 + $0x58] sm:$0xff]
        %v368 = vld [vmem:[%s349 + $0x60] sm:$0xff]
        %v369 = vld [vmem:[%s349 + $0x68] sm:$0xff]
        %v370 = vld [vmem:[%s349 + $0x70] sm:$0xff]
        %v371 = vld [vmem:[%s349 + $0x78] sm:$0xff]
        %v372 = vld [vmem:[%s349 + $0x80] sm:$0xff]
        %v373 = vld [vmem:[%s349 + $0x88] sm:$0xff]
        %v374 = vld [vmem:[%s349 + $0x90] sm:$0xff]
        %v375 = vld [vmem:[%s349 + $0x98] sm:$0xff]
        %v376 = vld [vmem:[%s349 + $0xa0] sm:$0xff]
        %v377 = vld [vmem:[%s349 + $0xa8] sm:$0xff]
        %v378 = vld [vmem:[%s349 + $0xb0] sm:$0xff]
        %v379 = vld [vmem:[%s349 + $0xb8] sm:$0xff]
        %v380 = vld [vmem:[%s349 + $0xc0] sm:$0xff]
        %v381 = vld [vmem:[%s349 + $0xc8] sm:$0xff]
        %v382 = vld [vmem:[%s349 + $0xd0] sm:$0xff]
        %v383 = vld [vmem:[%s349 + $0xd8] sm:$0xff]
        %v384 = vld [vmem:[%s349 + $0xe0] sm:$0xff]
        %v385 = vld [vmem:[%s349 + $0xe8] sm:$0xff]
        %v386 = vld [vmem:[%s349 + $0xf0] sm:$0xff]
        %v387 = vld [vmem:[%s349 + $0xf8] sm:$0xff]
        %v388 = vld [vmem:[%s1] sm:$0xff]
        %v389 = vld [vmem:[%s1 + $0x8] sm:$0xff]
        %v390 = vld [vmem:[%s1 + $0x10] sm:$0xff]
        %v391 = vld [vmem:[%s1 + $0x18] sm:$0xff]
        %v392 = vld [vmem:[%s2] sm:$0xff]
        %v393 = vld [vmem:[%s2 + $0x8] sm:$0xff]
        %v394 = vld [vmem:[%s2 + $0x10] sm:$0xff]
        %v395 = vld [vmem:[%s2 + $0x18] sm:$0xff]
        %397 = vset.pattern.permute.xlu0 0
        %398 = vperm.xlu0 %397, %v392
        %v399 = vpop.permute.xlu0 %398
        %402 = vset.pattern.permute.xlu0 0
        %403 = vperm.xlu0 %402, %v393
        %v404 = vpop.permute.xlu0 %403
        %407 = vset.pattern.permute.xlu0 0
        %408 = vperm.xlu0 %407, %v394
        %v409 = vpop.permute.xlu0 %408
        %412 = vset.pattern.permute.xlu0 0
        %413 = vperm.xlu0 %412, %v395
        %v414 = vpop.permute.xlu0 %413
        %vm416 = vcmask 130048
        %v418 = vsel %vm416, %v388, 0
        %v421 = vsel %vm416, %v389, 0
        %v424 = vsel %vm416, %v390, 0
        %v427 = vsel %vm416, %v391, 0
        %v430 = vsel %vm416, %v356, 0
        %v433 = vsel %vm416, %v357, 0
        %v436 = vsel %vm416, %v358, 0
        %v439 = vsel %vm416, %v359, 0
        %v442 = vsel %vm416, %v360, 0
        %v445 = vsel %vm416, %v361, 0
        %v448 = vsel %vm416, %v362, 0
        %v451 = vsel %vm416, %v363, 0
        %v454 = vsel %vm416, %v364, 0
        %v457 = vsel %vm416, %v365, 0
        %v460 = vsel %vm416, %v366, 0
        %v463 = vsel %vm416, %v367, 0
        %v466 = vsel %vm416, %v368, 0
        %v469 = vsel %vm416, %v369, 0
        %v472 = vsel %vm416, %v370, 0
        %v475 = vsel %vm416, %v371, 0
        %v478 = vsel %vm416, %v372, 0
        %v481 = vsel %vm416, %v373, 0
        %v484 = vsel %vm416, %v374, 0
        %v487 = vsel %vm416, %v375, 0
        %v490 = vsel %vm416, %v376, 0
        %v493 = vsel %vm416, %v377, 0
        %v496 = vsel %vm416, %v378, 0
        %v499 = vsel %vm416, %v379, 0
        %v502 = vsel %vm416, %v380, 0
        %v505 = vsel %vm416, %v381, 0
        %v508 = vsel %vm416, %v382, 0
        %v511 = vsel %vm416, %v383, 0
        %v514 = vsel %vm416, %v384, 0
        %v517 = vsel %vm416, %v385, 0
        %v520 = vsel %vm416, %v386, 0
        %v523 = vsel %vm416, %v387, 0
        %525 = vmatprep.subr.mxu0 0.0
        %526 = vmatpush1.xpose.msra.mxu0 %v430
        %527 = vmatprep.subr.mxu0 0.0
        %528 = vmatpush1.xpose.msra.mxu0 %v433
        %529 = vmatprep.subr.mxu0 0.0
        %530 = vmatpush1.xpose.msra.mxu0 %v436
        %531 = vmatprep.subr.mxu0 0.0
        %532 = vmatpush1.xpose.msra.mxu0 %v439
        %533 = vmatprep.subr.mxu0 0.0
        %534 = vmatpush1.xpose.msra.mxu0 %v442
        %535 = vmatprep.subr.mxu0 0.0
        %536 = vmatpush1.xpose.msra.mxu0 %v445
        %537 = vmatprep.subr.mxu0 0.0
        %538 = vmatpush1.xpose.msra.mxu0 %v448
        %539 = vmatprep.subr.mxu0 0.0
        %540 = vmatpush1.xpose.msra.mxu0 %v451
        %541 = vmatprep.subr.mxu0 0.0
        %542 = vmatpush1.xpose.msra.mxu0 %v454
        %543 = vmatprep.subr.mxu0 0.0
        %544 = vmatpush1.xpose.msra.mxu0 %v457
        %545 = vmatprep.subr.mxu0 0.0
        %546 = vmatpush1.xpose.msra.mxu0 %v460
        %547 = vmatprep.subr.mxu0 0.0
        %548 = vmatpush1.xpose.msra.mxu0 %v463
        %549 = vmatprep.subr.mxu0 0.0
        %550 = vmatpush1.xpose.msra.mxu0 %v466
        %551 = vmatprep.subr.mxu0 0.0
        %552 = vmatpush1.xpose.msra.mxu0 %v469
        %553 = vmatprep.subr.mxu0 0.0
        %554 = vmatpush1.xpose.msra.mxu0 %v472
        %555 = vmatprep.subr.mxu0 0.0
        %556 = vmatpush1.xpose.msra.mxu0 %v475
        %557 = vmatprep.subr.mxu0 0.0
        %558 = vmatpush1.xpose.msra.mxu0 %v478
        %559 = vmatprep.subr.mxu0 0.0
        %560 = vmatpush1.xpose.msra.mxu0 %v481
        %561 = vmatprep.subr.mxu0 0.0
        %562 = vmatpush1.xpose.msra.mxu0 %v484
        %563 = vmatprep.subr.mxu0 0.0
        %564 = vmatpush1.xpose.msra.mxu0 %v487
        %565 = vmatprep.subr.mxu0 0.0
        %566 = vmatpush1.xpose.msra.mxu0 %v490
        %567 = vmatprep.subr.mxu0 0.0
        %568 = vmatpush1.xpose.msra.mxu0 %v493
        %569 = vmatprep.subr.mxu0 0.0
        %570 = vmatpush1.xpose.msra.mxu0 %v496
        %571 = vmatprep.subr.mxu0 0.0
        %572 = vmatpush1.xpose.msra.mxu0 %v499
        %573 = vmatprep.subr.mxu0 0.0
        %574 = vmatpush1.xpose.msra.mxu0 %v502
        %575 = vmatprep.subr.mxu0 0.0
        %576 = vmatpush1.xpose.msra.mxu0 %v505
        %577 = vmatprep.subr.mxu0 0.0
        %578 = vmatpush1.xpose.msra.mxu0 %v508
        %579 = vmatprep.subr.mxu0 0.0
        %580 = vmatpush1.xpose.msra.mxu0 %v511
        %581 = vmatprep.subr.mxu0 0.0
        %582 = vmatpush1.xpose.msra.mxu0 %v514
        %583 = vmatprep.subr.mxu0 0.0
        %584 = vmatpush1.xpose.msra.mxu0 %v517
        %585 = vmatprep.subr.mxu0 0.0
        %586 = vmatpush1.xpose.msra.mxu0 %v520
        %587 = vmatprep.subr.mxu0 0.0
        %588 = vmatpush1.xpose.msra.mxu0 %v523
        %589 = vmatprep.mubr.f32.mxu0 0.0
        %590 = vmatmul.mubr.f32.gmra.mrb[0].mxu0 %v418
        %v591 = vpop.f32.mrb[0].mxu0
        %v592 = vadd.f32 %v399, %v591
        %v593 = vpop.f32.mrb[0].mxu0
        %v594 = vadd.f32 %v399, %v593
        %595 = vmatprep.mubr.f32.mxu0 0.0
        %596 = vmatmul.mubr.f32.gmra.mrb[0].mxu0 %v421
        %v597 = vpop.f32.mrb[0].mxu0
        %v598 = vadd.f32 %v404, %v597
        %v599 = vpop.f32.mrb[0].mxu0
        %v600 = vadd.f32 %v404, %v599
        %601 = vmatprep.mubr.f32.mxu0 0.0
        %602 = vmatmul.mubr.f32.gmra.mrb[0].mxu0 %v424
        %v603 = vpop.f32.mrb[0].mxu0
        %v604 = vadd.f32 %v409, %v603
        %v605 = vpop.f32.mrb[0].mxu0
        %v606 = vadd.f32 %v409, %v605
        %607 = vmatprep.mubr.f32.mxu0 0.0
        %608 = vmatmul.mubr.f32.gmra.mrb[0].mxu0 %v427
        %v609 = vpop.f32.mrb[0].mxu0
        %v610 = vadd.f32 %v414, %v609
        %v611 = vpop.f32.mrb[0].mxu0
        %v612 = vadd.f32 %v414, %v611
        %613 = vdwg.mxu0
        %v614 = vmax.f32 %v592, 0.0
        %v615 = vmax.f32 %v594, 0.0
        %v616 = vmax.f32 %v598, 0.0
        %v617 = vmax.f32 %v600, 0.0
        %v618 = vmax.f32 %v604, 0.0
        %v619 = vmax.f32 %v606, 0.0
        %v620 = vmax.f32 %v610, 0.0
        %v621 = vmax.f32 %v612, 0.0
        %v622 = vld [vmem:[%s3] sm:$0xff]
        %v623 = vld [vmem:[%s3 + $0x8] sm:$0xff]
        %v624 = vld [vmem:[%s3 + $0x10] sm:$0xff]
        %v625 = vld [vmem:[%s3 + $0x18] sm:$0xff]
        %v626 = vld [vmem:[%s4] sm:$0xff]
        %v627 = vld [vmem:[%s4 + $0x8] sm:$0xff]
        %v628 = vld [vmem:[%s4 + $0x10] sm:$0xff]
        %v629 = vld [vmem:[%s4 + $0x18] sm:$0xff]
        %631 = vset.pattern.permute.xlu0 0
        %632 = vperm.xlu0 %631, %v626
        %v633 = vpop.permute.xlu0 %632
        %636 = vset.pattern.permute.xlu0 0
        %637 = vperm.xlu0 %636, %v627
        %v638 = vpop.permute.xlu0 %637
        %641 = vset.pattern.permute.xlu0 0
        %642 = vperm.xlu0 %641, %v628
        %v643 = vpop.permute.xlu0 %642
        %646 = vset.pattern.permute.xlu0 0
        %647 = vperm.xlu0 %646, %v629
        %v648 = vpop.permute.xlu0 %647
        %vm650 = vcmask 261120
        %v652 = vsel %vm650, %v622, 0
        %v655 = vsel %vm650, %v623, 0
        %v658 = vsel %vm650, %v624, 0
        %v661 = vsel %vm650, %v625, 0
        %663 = vmatprep.subr.mxu0 %v615
        %664 = vmatpush1.msra.mxu0 %v614
        %665 = vmatprep.subr.mxu0 %v617
        %666 = vmatpush1.msra.mxu0 %v616
        %667 = vmatprep.subr.mxu0 %v619
        %668 = vmatpush1.msra.mxu0 %v618
        %669 = vmatprep.subr.mxu0 %v621
        %670 = vmatpush1.msra.mxu0 %v620
        %671 = vmatprep.subr.mxu0 0.0
        %672 = vmatpush1.msra.mxu0 0.0
        %673 = vmatprep.subr.mxu0 0.0
        %674 = vmatpush1.msra.mxu0 0.0
        %675 = vmatprep.subr.mxu0 0.0
        %676 = vmatpush1.msra.mxu0 0.0
        %677 = vmatprep.subr.mxu0 0.0
        %678 = vmatpush1.msra.mxu0 0.0
        %679 = vmatprep.subr.mxu0 0.0
        %680 = vmatpush1.msra.mxu0 0.0
        %681 = vmatprep.subr.mxu0 0.0
        %682 = vmatpush1.msra.mxu0 0.0
        %683 = vmatprep.subr.mxu0 0.0
        %684 = vmatpush1.msra.mxu0 0.0
        %685 = vmatprep.subr.mxu0 0.0
        %686 = vmatpush1.msra.mxu0 0.0
        %687 = vmatprep.subr.mxu0 0.0
        %688 = vmatpush1.msra.mxu0 0.0
        %689 = vmatprep.subr.mxu0 0.0
        %690 = vmatpush1.msra.mxu0 0.0
        %691 = vmatprep.subr.mxu0 0.0
        %692 = vmatpush1.msra.mxu0 0.0
        %693 = vmatprep.subr.mxu0 0.0
        %694 = vmatpush1.msra.mxu0 0.0
        %695 = vmatprep.subr.mxu0 0.0
        %696 = vmatpush1.msra.mxu0 0.0
        %697 = vmatprep.subr.mxu0 0.0
        %698 = vmatpush1.msra.mxu0 0.0
        %699 = vmatprep.subr.mxu0 0.0
        %700 = vmatpush1.msra.mxu0 0.0
        %701 = vmatprep.subr.mxu0 0.0
        %702 = vmatpush1.msra.mxu0 0.0
        %703 = vmatprep.subr.mxu0 0.0
        %704 = vmatpush1.msra.mxu0 0.0
        %705 = vmatprep.subr.mxu0 0.0
        %706 = vmatpush1.msra.mxu0 0.0
        %707 = vmatprep.subr.mxu0 0.0
        %708 = vmatpush1.msra.mxu0 0.0
        %709 = vmatprep.subr.mxu0 0.0
        %710 = vmatpush1.msra.mxu0 0.0
        %711 = vmatprep.subr.mxu0 0.0
        %712 = vmatpush1.msra.mxu0 0.0
        %713 = vmatprep.subr.mxu0 0.0
        %714 = vmatpush1.msra.mxu0 0.0
        %715 = vmatprep.subr.mxu0 0.0
        %716 = vmatpush1.msra.mxu0 0.0
        %717 = vmatprep.subr.mxu0 0.0
        %718 = vmatpush1.msra.mxu0 0.0
        %719 = vmatprep.subr.mxu0 0.0
        %720 = vmatpush1.msra.mxu0 0.0
        %721 = vmatprep.subr.mxu0 0.0
        %722 = vmatpush1.msra.mxu0 0.0
        %723 = vmatprep.subr.mxu0 0.0
        %724 = vmatpush1.msra.mxu0 0.0
        %725 = vmatprep.subr.mxu0 0.0
        %726 = vmatpush1.msra.mxu0 0.0
        %727 = vmatprep.mubr.f32.mxu0 0.0
        %728 = vmatmul.mubr.f32.gmra.mrb[0].mxu0 %v652
        %v729 = vpop.f32.mrb[0].mxu0
        %v730 = vadd.f32 %v633, %v729
        %v731 = vpop.f32.mrb[0].mxu0
        %v732 = vadd.f32 %v633, %v731
        %733 = vmatprep.mubr.f32.mxu0 0.0
        %734 = vmatmul.mubr.f32.gmra.mrb[0].mxu0 %v655
        %v735 = vpop.f32.mrb[0].mxu0
        %v736 = vadd.f32 %v638, %v735
        %v737 = vpop.f32.mrb[0].mxu0
        %v738 = vadd.f32 %v638, %v737
        %739 = vmatprep.mubr.f32.mxu0 0.0
        %740 = vmatmul.mubr.f32.gmra.mrb[0].mxu0 %v658
        %v741 = vpop.f32.mrb[0].mxu0
        %v742 = vadd.f32 %v643, %v741
        %v743 = vpop.f32.mrb[0].mxu0
        %v744 = vadd.f32 %v643, %v743
        %745 = vmatprep.mubr.f32.mxu0 0.0
        %746 = vmatmul.mubr.f32.gmra.mrb[0].mxu0 %v661
        %v747 = vpop.f32.mrb[0].mxu0
        %v748 = vadd.f32 %v648, %v747
        %v749 = vpop.f32.mrb[0].mxu0
        %v750 = vadd.f32 %v648, %v749
        %751 = vdwg.mxu0
        %v752 = vmax.f32 %v730, 0.0
        %v753 = vmax.f32 %v732, 0.0
        %v754 = vmax.f32 %v736, 0.0
        %v755 = vmax.f32 %v738, 0.0
        %v756 = vmax.f32 %v742, 0.0
        %v757 = vmax.f32 %v744, 0.0
        %v758 = vmax.f32 %v748, 0.0
        %v759 = vmax.f32 %v750, 0.0
        %v760 = vld [vmem:[%s5] sm:$0xff]
        %v761 = vld [vmem:[%s5 + $0x8] sm:$0xff]
        %v762 = vld [vmem:[%s5 + $0x10] sm:$0xff]
        %v763 = vld [vmem:[%s5 + $0x18] sm:$0xff]
        %v764 = vld [vmem:[%s6] sm:$0xff]
        %v765 = vld [vmem:[%s6 + $0x8] sm:$0xff]
        %v766 = vld [vmem:[%s6 + $0x10] sm:$0xff]
        %v767 = vld [vmem:[%s6 + $0x18] sm:$0xff]
        %769 = vset.pattern.permute.xlu0 0
        %770 = vperm.xlu0 %769, %v764
        %v771 = vpop.permute.xlu0 %770
        %774 = vset.pattern.permute.xlu0 0
        %775 = vperm.xlu0 %774, %v765
        %v776 = vpop.permute.xlu0 %775
        %779 = vset.pattern.permute.xlu0 0
        %780 = vperm.xlu0 %779, %v766
        %v781 = vpop.permute.xlu0 %780
        %784 = vset.pattern.permute.xlu0 0
        %785 = vperm.xlu0 %784, %v767
        %v786 = vpop.permute.xlu0 %785
        %v789 = vsel %vm650, %v760, 0
        %v792 = vsel %vm650, %v761, 0
        %v795 = vsel %vm650, %v762, 0
        %v798 = vsel %vm650, %v763, 0
        %800 = vmatprep.subr.mxu0 %v753
        %801 = vmatpush1.msra.mxu0 %v752
        %802 = vmatprep.subr.mxu0 %v755
        %803 = vmatpush1.msra.mxu0 %v754
        %804 = vmatprep.subr.mxu0 %v757
        %805 = vmatpush1.msra.mxu0 %v756
        %806 = vmatprep.subr.mxu0 %v759
        %807 = vmatpush1.msra.mxu0 %v758
        %808 = vmatprep.subr.mxu0 0.0
        %809 = vmatpush1.msra.mxu0 0.0
        %810 = vmatprep.subr.mxu0 0.0
        %811 = vmatpush1.msra.mxu0 0.0
        %812 = vmatprep.subr.mxu0 0.0
        %813 = vmatpush1.msra.mxu0 0.0
        %814 = vmatprep.subr.mxu0 0.0
        %815 = vmatpush1.msra.mxu0 0.0
        %816 = vmatprep.subr.mxu0 0.0
        %817 = vmatpush1.msra.mxu0 0.0
        %818 = vmatprep.subr.mxu0 0.0
        %819 = vmatpush1.msra.mxu0 0.0
        %820 = vmatprep.subr.mxu0 0.0
        %821 = vmatpush1.msra.mxu0 0.0
        %822 = vmatprep.subr.mxu0 0.0
        %823 = vmatpush1.msra.mxu0 0.0
        %824 = vmatprep.subr.mxu0 0.0
        %825 = vmatpush1.msra.mxu0 0.0
        %826 = vmatprep.subr.mxu0 0.0
        %827 = vmatpush1.msra.mxu0 0.0
        %828 = vmatprep.subr.mxu0 0.0
        %829 = vmatpush1.msra.mxu0 0.0
        %830 = vmatprep.subr.mxu0 0.0
        %831 = vmatpush1.msra.mxu0 0.0
        %832 = vmatprep.subr.mxu0 0.0
        %833 = vmatpush1.msra.mxu0 0.0
        %834 = vmatprep.subr.mxu0 0.0
        %835 = vmatpush1.msra.mxu0 0.0
        %836 = vmatprep.subr.mxu0 0.0
        %837 = vmatpush1.msra.mxu0 0.0
        %838 = vmatprep.subr.mxu0 0.0
        %839 = vmatpush1.msra.mxu0 0.0
        %840 = vmatprep.subr.mxu0 0.0
        %841 = vmatpush1.msra.mxu0 0.0
        %842 = vmatprep.subr.mxu0 0.0
        %843 = vmatpush1.msra.mxu0 0.0
        %844 = vmatprep.subr.mxu0 0.0
        %845 = vmatpush1.msra.mxu0 0.0
        %846 = vmatprep.subr.mxu0 0.0
        %847 = vmatpush1.msra.mxu0 0.0
        %848 = vmatprep.subr.mxu0 0.0
        %849 = vmatpush1.msra.mxu0 0.0
        %850 = vmatprep.subr.mxu0 0.0
        %851 = vmatpush1.msra.mxu0 0.0
        %852 = vmatprep.subr.mxu0 0.0
        %853 = vmatpush1.msra.mxu0 0.0
        %854 = vmatprep.subr.mxu0 0.0
        %855 = vmatpush1.msra.mxu0 0.0
        %856 = vmatprep.subr.mxu0 0.0
        %857 = vmatpush1.msra.mxu0 0.0
        %858 = vmatprep.subr.mxu0 0.0
        %859 = vmatpush1.msra.mxu0 0.0
        %860 = vmatprep.subr.mxu0 0.0
        %861 = vmatpush1.msra.mxu0 0.0
        %862 = vmatprep.subr.mxu0 0.0
        %863 = vmatpush1.msra.mxu0 0.0
        %864 = vmatprep.mubr.f32.mxu0 0.0
        %865 = vmatmul.mubr.f32.gmra.mrb[0].mxu0 %v789
        %v866 = vpop.f32.mrb[0].mxu0
        %v867 = vadd.f32 %v771, %v866
        %v868 = vpop.f32.mrb[0].mxu0
        %v869 = vadd.f32 %v771, %v868
        %870 = vmatprep.mubr.f32.mxu0 0.0
        %871 = vmatmul.mubr.f32.gmra.mrb[0].mxu0 %v792
        %v872 = vpop.f32.mrb[0].mxu0
        %v873 = vadd.f32 %v776, %v872
        %v874 = vpop.f32.mrb[0].mxu0
        %v875 = vadd.f32 %v776, %v874
        %876 = vmatprep.mubr.f32.mxu0 0.0
        %877 = vmatmul.mubr.f32.gmra.mrb[0].mxu0 %v795
        %v878 = vpop.f32.mrb[0].mxu0
        %v879 = vadd.f32 %v781, %v878
        %v880 = vpop.f32.mrb[0].mxu0
        %v881 = vadd.f32 %v781, %v880
        %882 = vmatprep.mubr.f32.mxu0 0.0
        %883 = vmatmul.mubr.f32.gmra.mrb[0].mxu0 %v798
        %v884 = vpop.f32.mrb[0].mxu0
        %v885 = vadd.f32 %v786, %v884
        %v886 = vpop.f32.mrb[0].mxu0
        %v887 = vadd.f32 %v786, %v886
        %888 = vdwg.mxu0
        %v889 = vmax.f32 %v867, 0.0
        %v890 = vmax.f32 %v869, 0.0
        %v891 = vmax.f32 %v873, 0.0
        %v892 = vmax.f32 %v875, 0.0
        %v893 = vmax.f32 %v879, 0.0
        %v894 = vmax.f32 %v881, 0.0
        %v895 = vmax.f32 %v885, 0.0
        %v896 = vmax.f32 %v887, 0.0
        %v897 = vld [vmem:[%s7] sm:$0x1]
        %v898 = vld [vmem:[#allocation2] sm:$0x1]
        %900 = vset.pattern.permute.xlu0 0
        %901 = vperm.xlu0 %900, %v898
        %v902 = vpop.permute.xlu0 %901
        %v904 = vlaneseq
        %v905 = vshrl.u32 %v904, 7
        %v906 = vsub.s32 0, %v905
        %v907 = vrot.slane %v902, %v906
        %v909 = vsel %vm650, %v897, 0
        %911 = vmatprep.subr.mxu0 %v890
        %912 = vmatpush1.msra.mxu0 %v889
        %913 = vmatprep.subr.mxu0 %v892
        %914 = vmatpush1.msra.mxu0 %v891
        %915 = vmatprep.subr.mxu0 %v894
        %916 = vmatpush1.msra.mxu0 %v893
        %917 = vmatprep.subr.mxu0 %v896
        %918 = vmatpush1.msra.mxu0 %v895
        %919 = vmatprep.subr.mxu0 0.0
        %920 = vmatpush1.msra.mxu0 0.0
        %921 = vmatprep.subr.mxu0 0.0
        %922 = vmatpush1.msra.mxu0 0.0
        %923 = vmatprep.subr.mxu0 0.0
        %924 = vmatpush1.msra.mxu0 0.0
        %925 = vmatprep.subr.mxu0 0.0
        %926 = vmatpush1.msra.mxu0 0.0
        %927 = vmatprep.subr.mxu0 0.0
        %928 = vmatpush1.msra.mxu0 0.0
        %929 = vmatprep.subr.mxu0 0.0
        %930 = vmatpush1.msra.mxu0 0.0
        %931 = vmatprep.subr.mxu0 0.0
        %932 = vmatpush1.msra.mxu0 0.0
        %933 = vmatprep.subr.mxu0 0.0
        %934 = vmatpush1.msra.mxu0 0.0
        %935 = vmatprep.subr.mxu0 0.0
        %936 = vmatpush1.msra.mxu0 0.0
        %937 = vmatprep.subr.mxu0 0.0
        %938 = vmatpush1.msra.mxu0 0.0
        %939 = vmatprep.subr.mxu0 0.0
        %940 = vmatpush1.msra.mxu0 0.0
        %941 = vmatprep.subr.mxu0 0.0
        %942 = vmatpush1.msra.mxu0 0.0
        %943 = vmatprep.subr.mxu0 0.0
        %944 = vmatpush1.msra.mxu0 0.0
        %945 = vmatprep.subr.mxu0 0.0
        %946 = vmatpush1.msra.mxu0 0.0
        %947 = vmatprep.subr.mxu0 0.0
        %948 = vmatpush1.msra.mxu0 0.0
        %949 = vmatprep.subr.mxu0 0.0
        %950 = vmatpush1.msra.mxu0 0.0
        %951 = vmatprep.subr.mxu0 0.0
        %952 = vmatpush1.msra.mxu0 0.0
        %953 = vmatprep.subr.mxu0 0.0
        %954 = vmatpush1.msra.mxu0 0.0
        %955 = vmatprep.subr.mxu0 0.0
        %956 = vmatpush1.msra.mxu0 0.0
        %957 = vmatprep.subr.mxu0 0.0
        %958 = vmatpush1.msra.mxu0 0.0
        %959 = vmatprep.subr.mxu0 0.0
        %960 = vmatpush1.msra.mxu0 0.0
        %961 = vmatprep.subr.mxu0 0.0
        %962 = vmatpush1.msra.mxu0 0.0
        %963 = vmatprep.subr.mxu0 0.0
        %964 = vmatpush1.msra.mxu0 0.0
        %965 = vmatprep.subr.mxu0 0.0
        %966 = vmatpush1.msra.mxu0 0.0
        %967 = vmatprep.subr.mxu0 0.0
        %968 = vmatpush1.msra.mxu0 0.0
        %969 = vmatprep.subr.mxu0 0.0
        %970 = vmatpush1.msra.mxu0 0.0
        %971 = vmatprep.subr.mxu0 0.0
        %972 = vmatpush1.msra.mxu0 0.0
        %973 = vmatprep.subr.mxu0 0.0
        %974 = vmatpush1.msra.mxu0 0.0
        %975 = vmatprep.mubr.f32.mxu0 0.0
        %976 = vmatmul.mubr.f32.gmra.mrb[0].mxu0 %v909
        %v977 = vpop.f32.mrb[0].mxu0
        %v978 = vadd.f32 %v907, %v977
        %v979 = vpop.f32.mrb[0].mxu0
        %v980 = vadd.f32 %v907, %v979
        %981 = vdwg.mxu0
        %v984 = vcombine.low %v978, %v980
        %v986 = vunpack.c.l.s4 1966171168
        %v987 = vunpack.c.0.s8 %v986
        %v988 = vlaneseq
        %v989 = vshrl.u32 %v988, 7
        %v990 = vsub.s32 %v987, %v989
        %v991 = vrot.slane %v984, %v990
        %v993 = vunpack.c.l.s4 1966171168
        %v994 = vunpack.c.0.s8 %v993
        %v995 = vlaneseq
        %v996 = vshrl.u32 %v995, 7
        %v997 = vsub.s32 %v994, %v996
        %v998 = vrot.slane %v991, %v997
        %v1000 = vlaneseq
        %vm1001 = vcmp.ge.s32.totalorder %v1000, 0
        %vm1002 = vcmp.lt.s32.totalorder %v1000, 256
        %vm1003 = vmand %vm1001, %vm1002
        %1004 = vst.msk [vmem:[%s340] sm:$0x3] %vm1003, %v998
        %s1005 = sand.u32 %s227, 1
        %s1006 = scalar_lea.sflag [#allocation4], %s1005
        %s1007 = sand.u32 %s227, 1
        %s1008 = smul.addr %s1007, 2
        %s1009 = scalar_lea.vmem [#allocation3], %s1008
        // Predicated region
        $region57: #{config_dense_forward.1} parent=55 // pred_check
          %p1010 = pneg %p237
        $region58: #{config_dense_forward.1} parent=55 // pred_check_branch
          %1012 = sbr.rel (%p1010) target = $region60
        $region59: #{config_dense_forward.1} parent=55 // pred_region
          %s1013 = smul.u32 2, %s25
          %s1015 = ssub.s32 32, 32
          %1016 = vsyncadd %s1006, %s1015
          %s1017 = smul.addr %s1013, 16
          %s1018 = scalar_lea.hbm %s9, %s1017
          %s1020 = sshll.u32 %s1009, 4
          %s1021 = int_to_ptr.vmem [resolvable:$true] %s1020
          %1023 = dma.vmem_to_hbm [thread:$0]  %s1021, 32, %s1018, %s1006
        $region60: #{config_dense_forward.1} parent=55 // pred_fallthru
          _
      $region56: #{config_dense_forward.1} parent=5 // pred_fallthru
        _
      %p1024 = scmp.le.s32.totalorder 2, %s20
      // Predicated region
      $region61: #{config_dense_forward.1} parent=5 // pred_check
        %p1025 = pneg %p1024
      $region62: #{config_dense_forward.1} parent=5 // pred_check_branch
        %1027 = sbr.rel (%p1025) target = $region64
      $region63: #{config_dense_forward.1} parent=5 // pred_region
        %s1028 = ssub.s32 %s20, 2
        // Predicated region
        $region65: #{config_dense_forward.1} parent=63 // pred_check
          %p1029 = pneg %p243
        $region66: #{config_dense_forward.1} parent=63 // pred_check_branch
          %1031 = sbr.rel (%p1029) target = $region68
        $region67: #{config_dense_forward.1} parent=63 // pred_region
          %s1032 = sand.u32 %s228, 1
          %s1033 = scalar_lea.sflag [#allocation4], %s1032
          %s1034 = sand.u32 %s228, 1
          %s1035 = smul.addr %s1034, 2
          %s1036 = scalar_lea.vmem [#allocation3], %s1035
          %1037 = dma.done %s1033, 32
        $region68: #{config_dense_forward.1} parent=63 // pred_fallthru
          _
      $region64: #{config_dense_forward.1} parent=5 // pred_fallthru
        _
    $region6: #{config_dense_forward.1} parent=1 // loop_footer
      %s24 = sadd.s32 1, %s20
    $region7: #{config_dense_forward.1} parent=1 // loop_footer_branch
      %19 = sbr.rel target = $region3
    $region8: #{config_dense_forward.1} parent=1 // loop_exit
      _
    %1038 = vsyncpa [#allocation4], 1
    %s1039 = scalar_lea.sflag [#allocation4], 1
    %1040 = vsyncpa %s1039, 1

</llo_original>
